<compile_context>
chip_gen: v7x
topology: tpu7x:2x2x1
jax: 0.10.0
libtpu: 0.0.40
codegen_flags: <defaults>
</compile_context>

<pallas_src>
import jax
import jax.numpy as jnp
from jax.experimental import pallas as pl
from jax.experimental.pallas import tpu as pltpu


SUBLANE = 8           # sublane unit for the batch tile
MAX_BATCH_TILE = 128  # cap on rows per grid step (keeps image tile << VMEM)
LANE_PAD = 128        # pad n1 / n2 feature dims to full lane width


def b6_bsline_kernel(x_ref, wa_ref, ba_ref, wb_ref, bb_ref, out_ref):
    # x_ref : (BT, Cin, HW)  f32  -- NCHW image, spatial dims flattened (view)
    # wa_ref: (Cin, N1P)     bf16 -- wstem@w1@w2 * bn1_scale / (H*W), lane-padded
    # ba_ref: (1, N1P)       f32  -- (b1@w2 + b2) * bn1_scale + bn1_shift
    # wb_ref: (N1P, N2P)     bf16 -- w3 * bn2_scale, lane-padded
    # bb_ref: (1, N2P)       f32  -- b3 * bn2_scale + bn2_shift
    # out_ref:(BT, N2P)      f32

    # Global average pool folded as a plain f32 sum (1/HW is inside wa).
    pooled = jnp.sum(x_ref[...], axis=-1)                       # (BT, Cin) f32

    # Stage 1: pool-scale + stem + Linear(in_ch,10) + Linear(10,n1) + BN folded.
    h = jnp.dot(pooled.astype(jnp.bfloat16), wa_ref[...],
                preferred_element_type=jnp.float32) + ba_ref[...]   # (BT, N1P)
    h = h * jax.nn.sigmoid(h)                                       # Swish

    # Stage 2: Linear(n1,n2) + BN folded.
    o = jnp.dot(h.astype(jnp.bfloat16), wb_ref[...],
                preferred_element_type=jnp.float32) + bb_ref[...]   # (BT, N2P)
    out_ref[...] = o * jax.nn.sigmoid(o)                            # Swish


def fold_params(params, hw, n1_pad=LANE_PAD, n2_pad=LANE_PAD):
    """Pre-compose the affine chain into 2 weights + 2 biases (lane-padded)."""
    wstem, w1, b1, w2, b2, bn1s, bn1b, w3, b3, bn2s, bn2b = params
    cin = wstem.shape[0]
    n1 = w2.shape[1]
    n2 = w3.shape[1]

    # pooled_mean @ wstem @ w1 @ w2 * bn1s + ((b1@w2 + b2)*bn1s + bn1b)
    wa = (wstem @ w1 @ w2) * bn1s / float(hw)          # (Cin, n1), incl. 1/HW
    ba = (b1 @ w2 + b2) * bn1s + bn1b                  # (1, n1)
    wb = w3 * bn2s                                     # (n1, n2)
    bb = b3 * bn2s + bn2b                              # (1, n2)

    # Zero-pad feature dims to 128 lanes (dense MXU / unmasked vst; padding is
    # exact: padded columns stay 0 through swish and hit zero rows of wb).
    wa_p = jnp.zeros((cin, n1_pad), jnp.float32).at[:, :n1].set(wa)
    ba_p = jnp.zeros((1, n1_pad), jnp.float32).at[:, :n1].set(ba)
    wb_p = jnp.zeros((n1_pad, n2_pad), jnp.float32).at[:n1, :n2].set(wb)
    bb_p = jnp.zeros((1, n2_pad), jnp.float32).at[:, :n2].set(bb)

    return (wa_p.astype(jnp.bfloat16), ba_p,
            wb_p.astype(jnp.bfloat16), bb_p, n2)


def _round_up(x, m):
    return ((x + m - 1) // m) * m


def b6_bsline_forward(x_nchw, params):
    """x_nchw: (B, Cin, H, W) float32 (PyTorch layout). Returns (B, n2)."""
    B, Cin, H, W = x_nchw.shape
    hw = H * W
    wa, ba, wb, bb, n2 = fold_params(params, hw)
    n1p = wa.shape[1]
    n2p = wb.shape[1]

    # Pure view (no transpose / no extra HBM pass): pool directly from NCHW.
    x2 = x_nchw.reshape(B, Cin, hw)

    # Adaptive batch tile: biggest multiple-of-8 tile up to MAX_BATCH_TILE
    # (amortizes per-grid-step overhead for large batches; 8 for tiny ones).
    bt = min(MAX_BATCH_TILE, _round_up(B, SUBLANE))
    b_pad = _round_up(B, bt)
    if b_pad != B:
        x2 = jnp.pad(x2, ((0, b_pad - B), (0, 0), (0, 0)))

    out = pl.pallas_call(
        b6_bsline_kernel,
        out_shape=jax.ShapeDtypeStruct((b_pad, n2p), jnp.float32),
        grid=(b_pad // bt,),
        in_specs=[
            pl.BlockSpec((bt, Cin, hw), lambda i: (i, 0, 0)),   # image tile
            pl.BlockSpec((Cin, n1p), lambda i: (0, 0)),         # wa (resident)
            pl.BlockSpec((1, n1p), lambda i: (0, 0)),           # ba (resident)
            pl.BlockSpec((n1p, n2p), lambda i: (0, 0)),         # wb (resident)
            pl.BlockSpec((1, n2p), lambda i: (0, 0)),           # bb (resident)
        ],
        out_specs=pl.BlockSpec((bt, n2p), lambda i: (i, 0)),
        compiler_params=pltpu.CompilerParams(
            dimension_semantics=("parallel",),
            vmem_limit_bytes=32 * 1024 * 1024),
    )(x2, wa, ba, wb, bb)

    return out[:B, :n2]


def make_params(key, cin, in_ch, out_dim, n1, n2):
    """Deterministic synthetic parameters (PyTorch-ish uniform init)."""
    ks = jax.random.split(key, 12)

    def lin(kw, kb, fan_in, fan_out):
        bound = 1.0 / jnp.sqrt(fan_in)
        w = jax.random.uniform(kw, (fan_in, fan_out), jnp.float32, -bound, bound)
        b = jax.random.uniform(kb, (1, fan_out), jnp.float32, -bound, bound)
        return w, b

    wstem = jax.random.normal(ks[0], (cin, in_ch), jnp.float32) * 0.1
    w1, b1 = lin(ks[1], ks[2], in_ch, out_dim)      # Linear(in_ch, out_dim=10)
    w2, b2 = lin(ks[3], ks[4], out_dim, n1)         # Linear(10, n1)
    w3, b3 = lin(ks[5], ks[6], n1, n2)              # Linear(n1, n2)

    eps = 1e-5

    def bn_fold(km, kv, n):
        gamma = jnp.ones((1, n), jnp.float32)
        beta = jnp.zeros((1, n), jnp.float32)
        running_mean = jax.random.normal(km, (1, n), jnp.float32) * 0.05
        running_var = 1.0 + 0.1 * jax.random.uniform(kv, (1, n), jnp.float32)
        scale = gamma / jnp.sqrt(running_var + eps)
        shift = beta - running_mean * scale
        return scale, shift

    bn1s, bn1b = bn_fold(ks[7], ks[8], n1)
    bn2s, bn2b = bn_fold(ks[9], ks[10], n2)

    return (wstem, w1, b1, w2, b2, bn1s, bn1b, w3, b3, bn2s, bn2b)


if __name__ == "__main__":
    # Small shapes: batch=2, channels=4, spatial=16x16;
    # in_ch=64 (stand-in for EfficientNet-B6 feature dim),
    # args.out_dim=10 (required by Linear(10, n_meta_dim[0]) in myfc),
    # n_meta_dim=(32, 16).
    B, CIN, H, W = 2, 4, 16, 16
    IN_CH, OUT_DIM, N1, N2 = 64, 10, 32, 16

    key = jax.random.PRNGKey(0)
    kx, kp = jax.random.split(key)
    x = jax.random.normal(kx, (B, CIN, H, W), jnp.float32)   # PyTorch NCHW input
    params = make_params(kp, CIN, IN_CH, OUT_DIM, N1, N2)

    out = b6_bsline_forward(x, params)
    jax.block_until_ready(out)
    assert out.shape == (B, N2) and out.dtype == jnp.float32
    assert bool(jnp.all(jnp.isfinite(out)))
    print("KERNEL_OK")
</pallas_src>

<mosaic_0001>
module attributes {stable_mosaic.version = 11 : i64} {
  func.func @b6_bsline_kernel(%arg0: i32, %arg1: memref<8x4x256xf32, #tpu.memory_space<vmem>>, %arg2: memref<4x128xbf16, #tpu.memory_space<vmem>>, %arg3: memref<1x128xf32, #tpu.memory_space<vmem>>, %arg4: memref<128x128xbf16, #tpu.memory_space<vmem>>, %arg5: memref<1x128xf32, #tpu.memory_space<vmem>>, %arg6: memref<8x128xf32, #tpu.memory_space<vmem>>) attributes {dimension_semantics = [#tpu.dimension_semantics<parallel>], iteration_bounds = array<i64: 1>, scalar_prefetch = 0 : i64, scratch_operands = 0 : i64, tpu.core_type = #tpu.core_type<tc>, window_params = [{transform_indices = @transform_0, window_bounds = array<i64: 8, 4, 256>}, {pipeline_mode = #tpu.pipeline_mode<synchronous>, transform_indices = @transform_1, window_bounds = array<i64: 4, 128>}, {pipeline_mode = #tpu.pipeline_mode<synchronous>, transform_indices = @transform_2, window_bounds = array<i64: 1, 128>}, {pipeline_mode = #tpu.pipeline_mode<synchronous>, transform_indices = @transform_3, window_bounds = array<i64: 128, 128>}, {pipeline_mode = #tpu.pipeline_mode<synchronous>, transform_indices = @transform_4, window_bounds = array<i64: 1, 128>}, {transform_indices = @transform_5, window_bounds = array<i64: 8, 128>}]} {
    %c0 = arith.constant 0 : index
    %c0_0 = arith.constant 0 : index
    %c0_1 = arith.constant 0 : index
    %0 = vector.load %arg1[%c0, %c0_0, %c0_1] : memref<8x4x256xf32, #tpu.memory_space<vmem>>, vector<8x4x256xf32>
    %cst = arith.constant dense<0.000000e+00> : vector<8x4xf32>
    %1 = vector.multi_reduction <add>, %0, %cst [2] : vector<8x4x256xf32> to vector<8x4xf32>
    %2 = arith.truncf %1 : vector<8x4xf32> to vector<8x4xbf16>
    %c0_2 = arith.constant 0 : index
    %c0_3 = arith.constant 0 : index
    %3 = vector.load %arg2[%c0_2, %c0_3] : memref<4x128xbf16, #tpu.memory_space<vmem>>, vector<4x128xbf16>
    %cst_4 = arith.constant dense<0.000000e+00> : vector<8x128xf32>
    %4 = tpu.matmul %2, %3, %cst_4 {dimension_numbers = #tpu.dot_dimension_numbers<[1], [0], [0], [1], [0, 0, 1, 1], [], []>} : vector<8x4xbf16>, vector<4x128xbf16>, vector<8x128xf32> -> vector<8x128xf32>
    %c0_5 = arith.constant 0 : index
    %c0_6 = arith.constant 0 : index
    %5 = vector.load %arg3[%c0_5, %c0_6] : memref<1x128xf32, #tpu.memory_space<vmem>>, vector<1x128xf32>
    %6 = vector.broadcast %5 : vector<1x128xf32> to vector<8x128xf32>
    %7 = arith.addf %4, %6 : vector<8x128xf32>
    %8 = arith.negf %7 : vector<8x128xf32>
    %9 = math.exp %8 : vector<8x128xf32>
    %cst_7 = arith.constant 1.000000e+00 : f32
    %10 = vector.broadcast %cst_7 : f32 to vector<8x128xf32>
    %11 = arith.addf %10, %9 : vector<8x128xf32>
    %12 = arith.divf %10, %11 : vector<8x128xf32>
    %13 = arith.mulf %7, %12 : vector<8x128xf32>
    %14 = arith.truncf %13 : vector<8x128xf32> to vector<8x128xbf16>
    %c0_8 = arith.constant 0 : index
    %c0_9 = arith.constant 0 : index
    %15 = vector.load %arg4[%c0_8, %c0_9] : memref<128x128xbf16, #tpu.memory_space<vmem>>, vector<128x128xbf16>
    %cst_10 = arith.constant dense<0.000000e+00> : vector<8x128xf32>
    %16 = tpu.matmul %14, %15, %cst_10 {dimension_numbers = #tpu.dot_dimension_numbers<[1], [0], [0], [1], [0, 0, 1, 1], [], []>} : vector<8x128xbf16>, vector<128x128xbf16>, vector<8x128xf32> -> vector<8x128xf32>
    %c0_11 = arith.constant 0 : index
    %c0_12 = arith.constant 0 : index
    %17 = vector.load %arg5[%c0_11, %c0_12] : memref<1x128xf32, #tpu.memory_space<vmem>>, vector<1x128xf32>
    %18 = vector.broadcast %17 : vector<1x128xf32> to vector<8x128xf32>
    %19 = arith.addf %16, %18 : vector<8x128xf32>
    %20 = arith.negf %19 : vector<8x128xf32>
    %21 = math.exp %20 : vector<8x128xf32>
    %cst_13 = arith.constant 1.000000e+00 : f32
    %22 = vector.broadcast %cst_13 : f32 to vector<8x128xf32>
    %23 = arith.addf %22, %21 : vector<8x128xf32>
    %24 = arith.divf %22, %23 : vector<8x128xf32>
    %25 = arith.mulf %19, %24 : vector<8x128xf32>
    %c0_14 = arith.constant 0 : index
    %c0_15 = arith.constant 0 : index
    %26 = vector.load %arg6[%c0_14, %c0_15] : memref<8x128xf32, #tpu.memory_space<vmem>>, vector<8x128xf32>
    tpu.vector_store %arg6[%c0_14, %c0_15], %25 {strides = array<i32>} : memref<8x128xf32, #tpu.memory_space<vmem>>, vector<8x128xf32>,
    return
  }
  func.func @transform_0(%arg0: i32) -> (i32, i32, i32) {
    %c0_i32 = arith.constant 0 : i32
    %c0_i32_0 = arith.constant 0 : i32
    %c0_i32_1 = arith.constant 0 : i32
    return %arg0, %c0_i32, %c0_i32_0 : i32, i32, i32
  }
  func.func @transform_1(%arg0: i32) -> (i32, i32) {
    %c0_i32 = arith.constant 0 : i32
    %c0_i32_0 = arith.constant 0 : i32
    %c0_i32_1 = arith.constant 0 : i32
    return %c0_i32, %c0_i32_0 : i32, i32
  }
  func.func @transform_2(%arg0: i32) -> (i32, i32) {
    %c0_i32 = arith.constant 0 : i32
    %c0_i32_0 = arith.constant 0 : i32
    %c0_i32_1 = arith.constant 0 : i32
    return %c0_i32, %c0_i32_0 : i32, i32
  }
  func.func @transform_3(%arg0: i32) -> (i32, i32) {
    %c0_i32 = arith.constant 0 : i32
    %c0_i32_0 = arith.constant 0 : i32
    %c0_i32_1 = arith.constant 0 : i32
    return %c0_i32, %c0_i32_0 : i32, i32
  }
  func.func @transform_4(%arg0: i32) -> (i32, i32) {
    %c0_i32 = arith.constant 0 : i32
    %c0_i32_0 = arith.constant 0 : i32
    %c0_i32_1 = arith.constant 0 : i32
    return %c0_i32, %c0_i32_0 : i32, i32
  }
  func.func @transform_5(%arg0: i32) -> (i32, i32) {
    %c0_i32 = arith.constant 0 : i32
    %c0_i32_0 = arith.constant 0 : i32
    return %arg0, %c0_i32 : i32, i32
  }
}

</mosaic_0001>

<llo_original>
// kernel: tpu_custom_call.1
$region0: #{tpu_custom_call.1}
  #allocation0 [shape = 'u32[]', space=smem, size = 0x4, offset = 0x4, fixed_abs, tag = 'smem constant byte address 0x4 - core index']
  #allocation1 [shape = 'u32[144,128]{1,0:T(1,128)}', space=vmem, size = 0x12000, scoped, tag = 'internal scratch']
  %s0 = inlined_call_operand.hbm [shape: f32[8,4,256], index: 0, kind: input, shape index: {}]
  %s1 = inlined_call_operand.vmem [shape: bf16[4,128], index: 1, kind: input, shape index: {}]
  %s2 = inlined_call_operand.vmem [shape: f32[1,128], index: 2, kind: input, shape index: {}]
  %s3 = inlined_call_operand.hbm [shape: bf16[128,128], index: 3, kind: input, shape index: {}]
  %s4 = inlined_call_operand.vmem [shape: f32[1,128], index: 4, kind: input, shape index: {}]
  %s5 = inlined_call_operand.hbm [shape: f32[8,128], index: 5, kind: output, shape index: {}]
  %s6 = sld [smem:[#allocation0]]
  $region38: #{tpu_custom_call.1} parent=0
    _
  %s8 = ssub.s32 1, %s6
  %s9 = scalar_select 0, %s8, %s6
  $region1: #{tpu_custom_call.1} parent=0
    #allocation2 [shape = 'u8[32768]{0}', space=vmem, size = 0x8000, scoped, tag = 'input window, operand 0, single buffered']
    #allocation3 [shape = 's32[1]{0}', space=sflag, size = 0x4, scoped, tag = 'scoped memory for tpu_custom_call.1']
    #allocation4 [shape = 's32[1]{0}', space=sflag, size = 0x4, scoped, tag = 'scoped memory for tpu_custom_call.1']
    #allocation5 [shape = 'u8[32768]{0}', space=vmem, size = 0x8000, scoped, tag = 'input window, operand 3, single buffered']
    #allocation6 [shape = 's32[1]{0}', space=sflag, size = 0x4, scoped, tag = 'scoped memory for tpu_custom_call.1']
    #allocation7 [shape = 'u8[4096]{0}', space=vmem, size = 0x1000, scoped, tag = 'output window, operand 0, single buffered']
    %10 = vsyncpa [#allocation3], 0
    %11 = vsyncpa [#allocation6], 0
    %12 = vsyncpa [#allocation4], 0
    // Predicated region
    $region2: #{tpu_custom_call.1} parent=1 // pred_check
      _
    $region3: #{tpu_custom_call.1} parent=1 // pred_check_branch
      %14 = sbr.rel (0) target = $region5
    $region4: #{tpu_custom_call.1} parent=1 // pred_region
      %s16 = ssub.s32 1024, 1024
      %17 = vsyncadd [#allocation3], %s16
      %s18 = sshll.u32 [#allocation2], 4
      %s19 = int_to_ptr.vmem [resolvable:$true] %s18
      %24 = dma.hbm_to_vmem [thread:$0]  %s0, 1024, %s19, [#allocation3], 128, 128, 8
    $region5: #{tpu_custom_call.1} parent=1 // pred_fallthru
      _
    // Predicated region
    $region6: #{tpu_custom_call.1} parent=1 // pred_check
      _
    $region7: #{tpu_custom_call.1} parent=1 // pred_check_branch
      %26 = sbr.rel (0) target = $region9
    $region8: #{tpu_custom_call.1} parent=1 // pred_region
      _
    $region9: #{tpu_custom_call.1} parent=1 // pred_fallthru
      _
    // Predicated region
    $region10: #{tpu_custom_call.1} parent=1 // pred_check
      _
    $region11: #{tpu_custom_call.1} parent=1 // pred_check_branch
      %28 = sbr.rel (0) target = $region13
    $region12: #{tpu_custom_call.1} parent=1 // pred_region
      _
    $region13: #{tpu_custom_call.1} parent=1 // pred_fallthru
      _
    // Predicated region
    $region14: #{tpu_custom_call.1} parent=1 // pred_check
      _
    $region15: #{tpu_custom_call.1} parent=1 // pred_check_branch
      %30 = sbr.rel (0) target = $region17
    $region16: #{tpu_custom_call.1} parent=1 // pred_region
      %s32 = ssub.s32 1024, 1024
      %33 = vsyncadd [#allocation6], %s32
      %s34 = sshll.u32 [#allocation5], 4
      %s35 = int_to_ptr.vmem [resolvable:$true] %s34
      %40 = dma.hbm_to_vmem [thread:$0]  %s3, 1024, %s35, [#allocation6], 64, 64, 4
    $region17: #{tpu_custom_call.1} parent=1 // pred_fallthru
      _
    // Predicated region
    $region18: #{tpu_custom_call.1} parent=1 // pred_check
      _
    $region19: #{tpu_custom_call.1} parent=1 // pred_check_branch
      %42 = sbr.rel (0) target = $region21
    $region20: #{tpu_custom_call.1} parent=1 // pred_region
      _
    $region21: #{tpu_custom_call.1} parent=1 // pred_fallthru
      _
    // Predicated region
    $region22: #{tpu_custom_call.1} parent=1 // pred_check
      _
    $region23: #{tpu_custom_call.1} parent=1 // pred_check_branch
      %44 = sbr.rel (0) target = $region25
    $region24: #{tpu_custom_call.1} parent=1 // pred_region
      %45 = dma.done [#allocation3], 1024
    $region25: #{tpu_custom_call.1} parent=1 // pred_fallthru
      _
    // Predicated region
    $region26: #{tpu_custom_call.1} parent=1 // pred_check
      _
    $region27: #{tpu_custom_call.1} parent=1 // pred_check_branch
      %47 = sbr.rel (0) target = $region29
    $region28: #{tpu_custom_call.1} parent=1 // pred_region
      %48 = dma.done [#allocation6], 1024
    $region29: #{tpu_custom_call.1} parent=1 // pred_fallthru
      _
    %v50 = vld [vmem:[#allocation2] sm:$0xff]
    %v51 = vld [vmem:[#allocation2 + $0x8] sm:$0xff]
    %v52 = vld [vmem:[#allocation2 + $0x10] sm:$0xff]
    %v53 = vld [vmem:[#allocation2 + $0x18] sm:$0xff]
    %v54 = vld [vmem:[#allocation2 + $0x20] sm:$0xff]
    %v55 = vld [vmem:[#allocation2 + $0x28] sm:$0xff]
    %v56 = vld [vmem:[#allocation2 + $0x30] sm:$0xff]
    %v57 = vld [vmem:[#allocation2 + $0x38] sm:$0xff]
    %v66 = vcombine.high %v50, %v50
    %v67 = vcombine.high %v51, %v51
    %v68 = vcombine.high %v52, %v52
    %v69 = vcombine.high %v53, %v53
    %v70 = vcombine.high %v54, %v54
    %v71 = vcombine.high %v55, %v55
    %v72 = vcombine.high %v56, %v56
    %v73 = vcombine.high %v57, %v57
    %vm82 = vcmask 1043456
    %v83 = vsel %vm82, %v50, 0.0
    %v84 = vsel %vm82, %v66, 0.0
    %v85 = vadd.f32 %v83, %v84
    %86 = vadd.xlane.f32.xlu0 %v85
    %v87 = vpop.xlane.xlu0 %86
    %v88 = vsel %vm82, %v51, 0.0
    %v89 = vsel %vm82, %v67, 0.0
    %v90 = vadd.f32 %v88, %v89
    %91 = vadd.xlane.f32.xlu0 %v90
    %v92 = vpop.xlane.xlu0 %91
    %v93 = vsel %vm82, %v52, 0.0
    %v94 = vsel %vm82, %v68, 0.0
    %v95 = vadd.f32 %v93, %v94
    %96 = vadd.xlane.f32.xlu0 %v95
    %v97 = vpop.xlane.xlu0 %96
    %v98 = vsel %vm82, %v53, 0.0
    %v99 = vsel %vm82, %v69, 0.0
    %v100 = vadd.f32 %v98, %v99
    %101 = vadd.xlane.f32.xlu0 %v100
    %v102 = vpop.xlane.xlu0 %101
    %v103 = vsel %vm82, %v54, 0.0
    %v104 = vsel %vm82, %v70, 0.0
    %v105 = vadd.f32 %v103, %v104
    %106 = vadd.xlane.f32.xlu0 %v105
    %v107 = vpop.xlane.xlu0 %106
    %v108 = vsel %vm82, %v55, 0.0
    %v109 = vsel %vm82, %v71, 0.0
    %v110 = vadd.f32 %v108, %v109
    %111 = vadd.xlane.f32.xlu0 %v110
    %v112 = vpop.xlane.xlu0 %111
    %v113 = vsel %vm82, %v56, 0.0
    %v114 = vsel %vm82, %v72, 0.0
    %v115 = vadd.f32 %v113, %v114
    %116 = vadd.xlane.f32.xlu0 %v115
    %v117 = vpop.xlane.xlu0 %116
    %v118 = vsel %vm82, %v57, 0.0
    %v119 = vsel %vm82, %v73, 0.0
    %v120 = vadd.f32 %v118, %v119
    %121 = vadd.xlane.f32.xlu0 %v120
    %v122 = vpop.xlane.xlu0 %121
    %v123 = vpack.c.bf16 %v87, %v87
    %v124 = vpack.c.bf16 %v92, %v92
    %v125 = vpack.c.bf16 %v97, %v97
    %v126 = vpack.c.bf16 %v102, %v102
    %v127 = vpack.c.bf16 %v107, %v107
    %v128 = vpack.c.bf16 %v112, %v112
    %v129 = vpack.c.bf16 %v117, %v117
    %v130 = vpack.c.bf16 %v122, %v122
    %v131 = vld [vmem:[%s1] sm:$0x3]
    %v132 = vld [vmem:[%s2] sm:$0x1]
    %v134 = vlaneseq
    %v135 = vshrl.u32 %v134, 7
    %v136 = vsub.s32 0, %v135
    %v137 = vrot.slane %v132, %v136
    %v147 = vunpack.c.l.b16 %v123
    %v148 = vunpack.c.l.b16 %v124
    %v149 = vunpack.c.l.b16 %v125
    %v150 = vunpack.c.l.b16 %v126
    %v151 = vunpack.c.l.b16 %v127
    %v152 = vunpack.c.l.b16 %v128
    %v153 = vunpack.c.l.b16 %v129
    %v154 = vunpack.c.l.b16 %v130
    %v155 = vlaneseq
    %v156 = vand.u32 %v155, 127
    %v157 = vlaneseq
    %v158 = vshrl.u32 %v157, 7
    %v159 = vsub.s32 %v156, %v158
    %v160 = vrot.slane %v147, %v159
    %v161 = vlaneseq
    %v162 = vshrl.u32 %v161, 7
    %v163 = vsub.s32 %v156, %v162
    %v164 = vrot.slane %v148, %v163
    %v165 = vlaneseq
    %v166 = vshrl.u32 %v165, 7
    %v167 = vsub.s32 %v156, %v166
    %v168 = vrot.slane %v149, %v167
    %v169 = vlaneseq
    %v170 = vshrl.u32 %v169, 7
    %v171 = vsub.s32 %v156, %v170
    %v172 = vrot.slane %v150, %v171
    %v173 = vlaneseq
    %v174 = vshrl.u32 %v173, 7
    %v175 = vsub.s32 %v156, %v174
    %v176 = vrot.slane %v151, %v175
    %v177 = vlaneseq
    %v178 = vshrl.u32 %v177, 7
    %v179 = vsub.s32 %v156, %v178
    %v180 = vrot.slane %v152, %v179
    %v181 = vlaneseq
    %v182 = vshrl.u32 %v181, 7
    %v183 = vsub.s32 %v156, %v182
    %v184 = vrot.slane %v153, %v183
    %v185 = vlaneseq
    %v186 = vshrl.u32 %v185, 7
    %v187 = vsub.s32 %v156, %v186
    %v188 = vrot.slane %v154, %v187
    %vm189 = vcmask 1041409
    %v190 = vsel %vm189, %v164, %v160
    %vm191 = vcmask 1042434
    %v192 = vsel %vm191, %v168, %v190
    %vm193 = vcmask 1043459
    %v194 = vsel %vm193, %v172, %v192
    %vm195 = vcmask 1044484
    %v196 = vsel %vm195, %v176, %v194
    %vm197 = vcmask 1045509
    %v198 = vsel %vm197, %v180, %v196
    %vm199 = vcmask 1046534
    %v200 = vsel %vm199, %v184, %v198
    %vm201 = vcmask 1047559
    %v202 = vsel %vm201, %v188, %v200
    %v203 = vpack.c.b16 %v202, %v202
    %vm204 = vcmask 31744
    %v206 = vsel %vm204, %v203, 0
    %vm208 = vcmask 1041408
    %v210 = vsel %vm208, %v131, 0
    %212 = vmatprep.subr.bf16.mxu0 0
    %213 = vmatpush1.bf16.msra.mxu0 %v210
    %214 = vmatprep.subr.bf16.mxu0 0
    %215 = vmatpush1.bf16.msra.mxu0 0
    %216 = vmatprep.subr.bf16.mxu0 0
    %217 = vmatpush1.bf16.msra.mxu0 0
    %218 = vmatprep.subr.bf16.mxu0 0
    %219 = vmatpush1.bf16.msra.mxu0 0
    %220 = vmatprep.subr.bf16.mxu0 0
    %221 = vmatpush1.bf16.msra.mxu0 0
    %222 = vmatprep.subr.bf16.mxu0 0
    %223 = vmatpush1.bf16.msra.mxu0 0
    %224 = vmatprep.subr.bf16.mxu0 0
    %225 = vmatpush1.bf16.msra.mxu0 0
    %226 = vmatprep.subr.bf16.mxu0 0
    %227 = vmatpush1.bf16.msra.mxu0 0
    %228 = vmatprep.subr.bf16.mxu0 0
    %229 = vmatpush1.bf16.msra.mxu0 0
    %230 = vmatprep.subr.bf16.mxu0 0
    %231 = vmatpush1.bf16.msra.mxu0 0
    %232 = vmatprep.subr.bf16.mxu0 0
    %233 = vmatpush1.bf16.msra.mxu0 0
    %234 = vmatprep.subr.bf16.mxu0 0
    %235 = vmatpush1.bf16.msra.mxu0 0
    %236 = vmatprep.subr.bf16.mxu0 0
    %237 = vmatpush1.bf16.msra.mxu0 0
    %238 = vmatprep.subr.bf16.mxu0 0
    %239 = vmatpush1.bf16.msra.mxu0 0
    %240 = vmatprep.subr.bf16.mxu0 0
    %241 = vmatpush1.bf16.msra.mxu0 0
    %242 = vmatprep.subr.bf16.mxu0 0
    %243 = vmatpush1.bf16.msra.mxu0 0
    %244 = vmatprep.mubr.bf16.mxu0 0
    %245 = vmatmul.mubr.bf16.gmra.mrb[0].mxu0 %v206
    %v246 = vpop.f32.mrb[0].mxu0
    %v247 = vadd.f32 %v137, %v246
    %v248 = vpop.f32.mrb[0].mxu0
    %v249 = vpop.f32.mrb[0].mxu0
    %v250 = vpop.f32.mrb[0].mxu0
    %251 = vdwg.mxu0
    %v252 = vxor.u32 %v247, 2147483648
    %v253 = vmul.f32 %v252, 1.442695
    %v254 = vpow.pop %v253
    %v255 = vadd.f32 %v254, 1.0
    %v256 = vrcp.pop %v255
    %v257 = vmul.f32 1.0, %v256
    %v258 = vmul.f32 %v247, %v257
    %v259 = vpack.c.bf16 %v258, %v258
    %v260 = vld [vmem:[#allocation5] sm:$0xf]
    %v261 = vld [vmem:[#allocation5 + $0x4] sm:$0xf]
    %v262 = vld [vmem:[#allocation5 + $0x8] sm:$0xf]
    %v263 = vld [vmem:[#allocation5 + $0xc] sm:$0xf]
    %v264 = vld [vmem:[#allocation5 + $0x10] sm:$0xf]
    %v265 = vld [vmem:[#allocation5 + $0x14] sm:$0xf]
    %v266 = vld [vmem:[#allocation5 + $0x18] sm:$0xf]
    %v267 = vld [vmem:[#allocation5 + $0x1c] sm:$0xf]
    %v268 = vld [vmem:[#allocation5 + $0x20] sm:$0xf]
    %v269 = vld [vmem:[#allocation5 + $0x24] sm:$0xf]
    %v270 = vld [vmem:[#allocation5 + $0x28] sm:$0xf]
    %v271 = vld [vmem:[#allocation5 + $0x2c] sm:$0xf]
    %v272 = vld [vmem:[#allocation5 + $0x30] sm:$0xf]
    %v273 = vld [vmem:[#allocation5 + $0x34] sm:$0xf]
    %v274 = vld [vmem:[#allocation5 + $0x38] sm:$0xf]
    %v275 = vld [vmem:[#allocation5 + $0x3c] sm:$0xf]
    %v276 = vld [vmem:[%s4] sm:$0x1]
    %v278 = vlaneseq
    %v279 = vshrl.u32 %v278, 7
    %v280 = vsub.s32 0, %v279
    %v281 = vrot.slane %v276, %v280
    %v299 = vunpack.c.l.b16 %v260
    %v300 = vunpack.c.l.b16 %v261
    %v301 = vunpack.c.l.b16 %v262
    %v302 = vunpack.c.l.b16 %v263
    %v303 = vunpack.c.l.b16 %v264
    %v304 = vunpack.c.l.b16 %v265
    %v305 = vunpack.c.l.b16 %v266
    %v306 = vunpack.c.l.b16 %v267
    %v307 = vunpack.c.l.b16 %v268
    %v308 = vunpack.c.l.b16 %v269
    %v309 = vunpack.c.l.b16 %v270
    %v310 = vunpack.c.l.b16 %v271
    %v311 = vunpack.c.l.b16 %v272
    %v312 = vunpack.c.l.b16 %v273
    %v313 = vunpack.c.l.b16 %v274
    %v314 = vunpack.c.l.b16 %v275
    %v315 = vpack.c.b16 %v300, %v299
    %v316 = vpack.c.b16 %v302, %v301
    %v317 = vpack.c.b16 %v304, %v303
    %v318 = vpack.c.b16 %v306, %v305
    %v319 = vpack.c.b16 %v308, %v307
    %v320 = vpack.c.b16 %v310, %v309
    %v321 = vpack.c.b16 %v312, %v311
    %v322 = vpack.c.b16 %v314, %v313
    %331 = vmatprep.subr.bf16.mxu0 0
    %332 = vmatpush1.bf16.msra.mxu0 %v315
    %333 = vmatprep.subr.bf16.mxu0 0
    %334 = vmatpush1.bf16.msra.mxu0 %v316
    %335 = vmatprep.subr.bf16.mxu0 0
    %336 = vmatpush1.bf16.msra.mxu0 %v317
    %337 = vmatprep.subr.bf16.mxu0 0
    %338 = vmatpush1.bf16.msra.mxu0 %v318
    %339 = vmatprep.subr.bf16.mxu0 0
    %340 = vmatpush1.bf16.msra.mxu0 %v319
    %341 = vmatprep.subr.bf16.mxu0 0
    %342 = vmatpush1.bf16.msra.mxu0 %v320
    %343 = vmatprep.subr.bf16.mxu0 0
    %344 = vmatpush1.bf16.msra.mxu0 %v321
    %345 = vmatprep.subr.bf16.mxu0 0
    %346 = vmatpush1.bf16.msra.mxu0 %v322
    %347 = vmatprep.subr.bf16.mxu0 0
    %348 = vmatpush1.bf16.msra.mxu0 0
    %349 = vmatprep.subr.bf16.mxu0 0
    %350 = vmatpush1.bf16.msra.mxu0 0
    %351 = vmatprep.subr.bf16.mxu0 0
    %352 = vmatpush1.bf16.msra.mxu0 0
    %353 = vmatprep.subr.bf16.mxu0 0
    %354 = vmatpush1.bf16.msra.mxu0 0
    %355 = vmatprep.subr.bf16.mxu0 0
    %356 = vmatpush1.bf16.msra.mxu0 0
    %357 = vmatprep.subr.bf16.mxu0 0
    %358 = vmatpush1.bf16.msra.mxu0 0
    %359 = vmatprep.subr.bf16.mxu0 0
    %360 = vmatpush1.bf16.msra.mxu0 0
    %361 = vmatprep.subr.bf16.mxu0 0
    %362 = vmatpush1.bf16.msra.mxu0 0
    %363 = vmatprep.mubr.bf16.mxu0 0
    %364 = vmatmul.mubr.bf16.gmra.mrb[0].mxu0 %v259
    %v365 = vpop.f32.mrb[0].mxu0
    %v366 = vadd.f32 %v281, %v365
    %v367 = vpop.f32.mrb[0].mxu0
    %v368 = vpop.f32.mrb[0].mxu0
    %v369 = vpop.f32.mrb[0].mxu0
    %370 = vdwg.mxu0
    %v371 = vxor.u32 %v366, 2147483648
    %v372 = vmul.f32 %v371, 1.442695
    %v373 = vpow.pop %v372
    %v374 = vadd.f32 %v373, 1.0
    %v375 = vrcp.pop %v374
    %v376 = vmul.f32 1.0, %v375
    %v377 = vmul.f32 %v366, %v376
    %378 = vst [vmem:[#allocation7] sm:$0xff] %v377
    // Predicated region
    $region30: #{tpu_custom_call.1} parent=1 // pred_check
      _
    $region31: #{tpu_custom_call.1} parent=1 // pred_check_branch
      %380 = sbr.rel (0) target = $region33
    $region32: #{tpu_custom_call.1} parent=1 // pred_region
      %s382 = ssub.s32 128, 128
      %383 = vsyncadd [#allocation4], %s382
      %s385 = sshll.u32 [#allocation7], 4
      %s386 = int_to_ptr.vmem [resolvable:$true] %s385
      %388 = dma.vmem_to_hbm [thread:$0]  %s386, 128, %s5, [#allocation4]
    $region33: #{tpu_custom_call.1} parent=1 // pred_fallthru
      _
    // Predicated region
    $region34: #{tpu_custom_call.1} parent=1 // pred_check
      _
    $region35: #{tpu_custom_call.1} parent=1 // pred_check_branch
      %390 = sbr.rel (0) target = $region37
    $region36: #{tpu_custom_call.1} parent=1 // pred_region
      %391 = dma.done [#allocation4], 128
    $region37: #{tpu_custom_call.1} parent=1 // pred_fallthru
      _
    %392 = vsyncpa [#allocation3], 1
    %393 = vsyncpa [#allocation6], 1
    %394 = vsyncpa [#allocation4], 1

</llo_original>
